<compile_context>
chip_gen: v5e
topology: v5e:2x2
jax: 0.10.0
libtpu: 0.0.40
codegen_flags: <defaults>
</compile_context>

<pallas_src>
import functools

import numpy as np
import jax
import jax.numpy as jnp
from jax.experimental import pallas as pl
from jax.experimental.pallas import tpu as pltpu


def _round_up(x, m):
    return ((x + m - 1) // m) * m


def _double_conv_kernel(x_ref, w1_ref, b1_ref, w2_ref, b2_ref, mask_ref,
                        o_ref, patches_ref, *, H, W, f, nb, cin_p, cout_p, cout):
    """Fused Conv2d('same')+LeakyReLU -> Conv2d('same')+LeakyReLU for NB images.

    x_ref      : (NB, Cin_p,  H*W)      channels-in-sublanes, spatial-in-lanes
    w1_ref     : (Cout_p, f*f*Cin_p)    im2col weights, K ordered (kh, kw, ci)
    b1_ref     : (Cout_p, 1)
    w2_ref     : (Cout_p, f*f*Cout_p)
    b2_ref     : (Cout_p, 1)
    mask_ref   : (f*f, H*W)             precomputed 0/1 boundary masks per tap
    o_ref      : (NB, Cout, H*W)        true (unpadded) Cout
    patches_ref: (f*f*max(Cin_p,Cout_p), H*W) f32 VMEM scratch (shared)
    """
    HW = H * W
    p = (f - 1) // 2
    # Flat lane shift per filter tap, ordered (kh, kw) to match the (kh, kw, ci)
    # K-ordering of the packed weights and of the host-built masks.
    shifts = [(kh - p) * W + (kw - p) for kh in range(f) for kw in range(f)]

    masks = mask_ref[...]                                    # (f*f, HW), loaded once

    def conv_lrelu(a, c, w_ref, b_ref):
        # a: (c, HW) f32.  Build im2col patches directly into the shared,
        # tile-aligned VMEM scratch (no concatenate / relayout), then one MXU
        # matmul with f32 accumulation and bias + LeakyReLU epilogue.
        for t, s in enumerate(shifts):
            shifted = a if s == 0 else pltpu.roll(a, shift=(-s) % HW, axis=1)
            patches_ref[pl.ds(t * c, c), :] = shifted * masks[t:t + 1, :]
        patches = patches_ref[pl.ds(0, f * f * c), :]        # (f*f*c, HW)
        y = jnp.dot(w_ref[...], patches,
                    preferred_element_type=jnp.float32)      # (cout_p, HW)
        y = y + b_ref[...]                                    # lane broadcast
        return jnp.where(y > 0, y, 0.01 * y)                  # LeakyReLU(0.01)

    # Static (unrolled) loop over the NB images of this grid step: amortizes
    # per-step overhead; the intermediate activation stays in vregs/VMEM.
    for i in range(nb):
        x = x_ref[i].astype(jnp.float32)                      # (cin_p, HW)
        y1 = conv_lrelu(x, cin_p, w1_ref, b1_ref)
        y2 = conv_lrelu(y1, cout_p, w2_ref, b2_ref)
        o_ref[i] = y2[:cout].astype(o_ref.dtype)              # true-Cout store


def _double_conv01_forward(x_nchw, params):
    """Forward of double_conv01 on NCHW input (PyTorch convention)."""
    w1, b1, w2, b2 = params            # PyTorch layouts: (Cout, Cin, f, f), (Cout,)
    N, Cin, H, W = x_nchw.shape
    Cout = w1.shape[0]
    f = w1.shape[2]
    HW = H * W
    assert f % 2 == 1, "odd filter size assumed for symmetric 'same' padding"
    # TODO(synk): even f_size with PyTorch 'same' (asymmetric pad) not implemented.

    # Pad channel dims to a multiple of 8 (sublane tile) for clean layouts.
    Cin_p = _round_up(Cin, 8)
    Cout_p = _round_up(Cout, 8)
    Cmax_p = max(Cin_p, Cout_p)

    # ---- images per grid step (NB) --------------------------------------
    # Pick NB from a per-step VMEM block budget, but keep >= 2 grid steps when
    # N >= 2 so the parallel batch axis still uses both v7x TensorCores.
    per_image_block_bytes = 2 * (Cin_p + Cout) * HW * 4       # dbl-buffered in+out
    budget = 8 << 20
    nb = max(1, min(N, budget // max(per_image_block_bytes, 1)))
    if N >= 2:
        nb = min(nb, max(1, N // 2))
    n_pad = _round_up(N, nb)
    grid_len = n_pad // nb

    # ---- pack operands ----------------------------------------------------
    x_flat = x_nchw.reshape(N, Cin, HW)
    x_flat = jnp.pad(x_flat, ((0, n_pad - N), (0, Cin_p - Cin), (0, 0)))

    def pack_w(w, cin, cin_p):
        # (Cout, cin, f, f) -> zero-pad -> (Cout_p, f*f*cin_p), K ordered (kh, kw, ci)
        wp = jnp.pad(w, ((0, Cout_p - Cout), (0, cin_p - cin), (0, 0), (0, 0)))
        return jnp.transpose(wp, (0, 2, 3, 1)).reshape(Cout_p, f * f * cin_p)

    w1m = pack_w(w1, Cin, Cin_p)
    w2m = pack_w(w2, Cout, Cout_p)
    b1c = jnp.pad(b1, (0, Cout_p - Cout)).reshape(Cout_p, 1)
    b2c = jnp.pad(b2, (0, Cout_p - Cout)).reshape(Cout_p, 1)

    # Host-precomputed per-tap boundary masks (compile-time constant), (f*f, HW).
    pos = np.arange(HW)
    hh, ww = pos // W, pos % W
    pctr = (f - 1) // 2
    mask_rows = []
    for kh in range(f):
        for kw in range(f):
            dh, dw = kh - pctr, kw - pctr
            mask_rows.append((hh + dh >= 0) & (hh + dh < H) &
                             (ww + dw >= 0) & (ww + dw < W))
    maskm = jnp.asarray(np.stack(mask_rows).astype(np.float32))

    # ---- VMEM footprint estimate -> explicit scoped limit ------------------
    est = (2 * nb * Cin_p * HW * 4 +                         # x blocks (dbl-buffered)
           2 * nb * Cout * HW * 4 +                          # out blocks
           2 * (w1m.size + w2m.size + b1c.size + b2c.size + maskm.size) * 4 +
           f * f * Cmax_p * HW * 4)                          # patches scratch
    vmem_limit = int(min(max(2 * est, 32 << 20), 64 << 20))

    kernel = functools.partial(_double_conv_kernel, H=H, W=W, f=f, nb=nb,
                               cin_p=Cin_p, cout_p=Cout_p, cout=Cout)
    out_flat = pl.pallas_call(
        kernel,
        out_shape=jax.ShapeDtypeStruct((n_pad, Cout, HW), x_nchw.dtype),
        grid=(grid_len,),
        in_specs=[
            pl.BlockSpec((nb, Cin_p, HW), lambda n: (n, 0, 0)),
            pl.BlockSpec((Cout_p, f * f * Cin_p), lambda n: (0, 0)),
            pl.BlockSpec((Cout_p, 1), lambda n: (0, 0)),
            pl.BlockSpec((Cout_p, f * f * Cout_p), lambda n: (0, 0)),
            pl.BlockSpec((Cout_p, 1), lambda n: (0, 0)),
            pl.BlockSpec((f * f, HW), lambda n: (0, 0)),
        ],
        out_specs=pl.BlockSpec((nb, Cout, HW), lambda n: (n, 0, 0)),
        scratch_shapes=[pltpu.VMEM((f * f * Cmax_p, HW), jnp.float32)],
        compiler_params=pltpu.CompilerParams(
            dimension_semantics=("parallel",),
            vmem_limit_bytes=vmem_limit),
    )(x_flat, w1m, b1c, w2m, b2c, maskm)

    out = out_flat[:N].reshape(N, Cout, H, W)   # no-op slice when N % nb == 0
    return out


double_conv01_forward = jax.jit(_double_conv01_forward)


def init_double_conv01_params(key, in_channels, out_channels, f_size):
    """Deterministic synthetic parameters in PyTorch layout (Cout, Cin, f, f)."""
    k1, k2, k3, k4 = jax.random.split(key, 4)
    w1 = jax.random.normal(
        k1, (out_channels, in_channels, f_size, f_size), jnp.float32) * 0.1
    b1 = jax.random.normal(k2, (out_channels,), jnp.float32) * 0.1
    w2 = jax.random.normal(
        k3, (out_channels, out_channels, f_size, f_size), jnp.float32) * 0.1
    b2 = jax.random.normal(k4, (out_channels,), jnp.float32) * 0.1
    return (w1, b1, w2, b2)


def _reference_forward(x_nchw, params):
    """Pure-JAX reference (lax conv) for correctness check."""
    w1, b1, w2, b2 = params

    def conv(x, w, b):
        y = jax.lax.conv_general_dilated(
            x, w, window_strides=(1, 1), padding="SAME",
            dimension_numbers=("NCHW", "OIHW", "NCHW"))
        y = y + b[None, :, None, None]
        return jnp.where(y > 0, y, 0.01 * y)

    return conv(conv(x_nchw, w1, b1), w2, b2)


if __name__ == "__main__":
    key = jax.random.PRNGKey(0)
    k_x, k_p = jax.random.split(key)

    in_channels, out_channels, f_size = 4, 8, 3
    N, H, W = 2, 16, 16

    x = jax.random.normal(k_x, (N, in_channels, H, W), jnp.float32)
    params = init_double_conv01_params(k_p, in_channels, out_channels, f_size)

    out = double_conv01_forward(x, params)
    out = jax.block_until_ready(out)

    ref = _reference_forward(x, params)
    assert out.shape == (N, out_channels, H, W)
    assert jnp.allclose(out, ref, atol=1e-4, rtol=1e-4), "mismatch vs reference"

    print("KERNEL_OK")
</pallas_src>

<mosaic_0001>
module attributes {stable_mosaic.version = 11 : i64} {
  func.func @_double_conv_kernel(%arg0: i32, %arg1: memref<1x8x256xf32, #tpu.memory_space<vmem>>, %arg2: memref<8x72xf32, #tpu.memory_space<vmem>>, %arg3: memref<8x1xf32, #tpu.memory_space<vmem>>, %arg4: memref<8x72xf32, #tpu.memory_space<vmem>>, %arg5: memref<8x1xf32, #tpu.memory_space<vmem>>, %arg6: memref<9x256xf32, #tpu.memory_space<vmem>>, %arg7: memref<1x8x256xf32, #tpu.memory_space<vmem>>, %arg8: memref<72x256xf32, #tpu.memory_space<vmem>>) attributes {dimension_semantics = [#tpu.dimension_semantics<parallel>], iteration_bounds = array<i64: 2>, scalar_prefetch = 0 : i64, scratch_operands = 1 : i64, tpu.core_type = #tpu.core_type<tc>, window_params = [{transform_indices = @transform_0, window_bounds = array<i64: 1, 8, 256>}, {pipeline_mode = #tpu.pipeline_mode<synchronous>, transform_indices = @transform_1, window_bounds = array<i64: 8, 72>}, {pipeline_mode = #tpu.pipeline_mode<synchronous>, transform_indices = @transform_2, window_bounds = array<i64: 8, 1>}, {pipeline_mode = #tpu.pipeline_mode<synchronous>, transform_indices = @transform_3, window_bounds = array<i64: 8, 72>}, {pipeline_mode = #tpu.pipeline_mode<synchronous>, transform_indices = @transform_4, window_bounds = array<i64: 8, 1>}, {pipeline_mode = #tpu.pipeline_mode<synchronous>, transform_indices = @transform_5, window_bounds = array<i64: 9, 256>}, {transform_indices = @transform_6, window_bounds = array<i64: 1, 8, 256>}]} {
    %c0 = arith.constant 0 : index
    %c0_0 = arith.constant 0 : index
    %0 = vector.load %arg6[%c0, %c0_0] : memref<9x256xf32, #tpu.memory_space<vmem>>, vector<9x256xf32>
    %c0_1 = arith.constant 0 : index
    %c0_2 = arith.constant 0 : index
    %c0_3 = arith.constant 0 : index
    %1 = vector.load %arg1[%c0_1, %c0_2, %c0_3] : memref<1x8x256xf32, #tpu.memory_space<vmem>>, vector<1x8x256xf32>
    %2 = vector.shape_cast %1 : vector<1x8x256xf32> to vector<8x256xf32>
    %c17_i32 = arith.constant 17 : i32
    %3 = tpu.dynamic_rotate %2 by %c17_i32 dim 1 : vector<8x256xf32>, i32 -> vector<8x256xf32>
    %4 = vector.extract_strided_slice %0 {offsets = [0, 0], sizes = [1, 256], strides = [1, 1]} : vector<9x256xf32> to vector<1x256xf32>
    %5 = vector.broadcast %4 : vector<1x256xf32> to vector<8x256xf32>
    %6 = arith.mulf %3, %5 : vector<8x256xf32>
    %c0_4 = arith.constant 0 : index
    %c0_5 = arith.constant 0 : index
    %7 = vector.load %arg8[%c0_4, %c0_5] : memref<72x256xf32, #tpu.memory_space<vmem>>, vector<8x256xf32>
    tpu.vector_store %arg8[%c0_4, %c0_5], %6 {strides = array<i32>} : memref<72x256xf32, #tpu.memory_space<vmem>>, vector<8x256xf32>,
    %c16_i32 = arith.constant 16 : i32
    %8 = tpu.dynamic_rotate %2 by %c16_i32 dim 1 : vector<8x256xf32>, i32 -> vector<8x256xf32>
    %9 = vector.extract_strided_slice %0 {offsets = [1, 0], sizes = [1, 256], strides = [1, 1]} : vector<9x256xf32> to vector<1x256xf32>
    %10 = vector.broadcast %9 : vector<1x256xf32> to vector<8x256xf32>
    %11 = arith.mulf %8, %10 : vector<8x256xf32>
    %c8 = arith.constant 8 : index
    %c0_6 = arith.constant 0 : index
    %12 = vector.load %arg8[%c8, %c0_6] : memref<72x256xf32, #tpu.memory_space<vmem>>, vector<8x256xf32>
    tpu.vector_store %arg8[%c8, %c0_6], %11 {strides = array<i32>} : memref<72x256xf32, #tpu.memory_space<vmem>>, vector<8x256xf32>,
    %c15_i32 = arith.constant 15 : i32
    %13 = tpu.dynamic_rotate %2 by %c15_i32 dim 1 : vector<8x256xf32>, i32 -> vector<8x256xf32>
    %14 = vector.extract_strided_slice %0 {offsets = [2, 0], sizes = [1, 256], strides = [1, 1]} : vector<9x256xf32> to vector<1x256xf32>
    %15 = vector.broadcast %14 : vector<1x256xf32> to vector<8x256xf32>
    %16 = arith.mulf %13, %15 : vector<8x256xf32>
    %c16 = arith.constant 16 : index
    %c0_7 = arith.constant 0 : index
    %17 = vector.load %arg8[%c16, %c0_7] : memref<72x256xf32, #tpu.memory_space<vmem>>, vector<8x256xf32>
    tpu.vector_store %arg8[%c16, %c0_7], %16 {strides = array<i32>} : memref<72x256xf32, #tpu.memory_space<vmem>>, vector<8x256xf32>,
    %c1_i32 = arith.constant 1 : i32
    %18 = tpu.dynamic_rotate %2 by %c1_i32 dim 1 : vector<8x256xf32>, i32 -> vector<8x256xf32>
    %19 = vector.extract_strided_slice %0 {offsets = [3, 0], sizes = [1, 256], strides = [1, 1]} : vector<9x256xf32> to vector<1x256xf32>
    %20 = vector.broadcast %19 : vector<1x256xf32> to vector<8x256xf32>
    %21 = arith.mulf %18, %20 : vector<8x256xf32>
    %c24 = arith.constant 24 : index
    %c0_8 = arith.constant 0 : index
    %22 = vector.load %arg8[%c24, %c0_8] : memref<72x256xf32, #tpu.memory_space<vmem>>, vector<8x256xf32>
    tpu.vector_store %arg8[%c24, %c0_8], %21 {strides = array<i32>} : memref<72x256xf32, #tpu.memory_space<vmem>>, vector<8x256xf32>,
    %23 = vector.extract_strided_slice %0 {offsets = [4, 0], sizes = [1, 256], strides = [1, 1]} : vector<9x256xf32> to vector<1x256xf32>
    %24 = vector.broadcast %23 : vector<1x256xf32> to vector<8x256xf32>
    %25 = arith.mulf %2, %24 : vector<8x256xf32>
    %c32 = arith.constant 32 : index
    %c0_9 = arith.constant 0 : index
    %26 = vector.load %arg8[%c32, %c0_9] : memref<72x256xf32, #tpu.memory_space<vmem>>, vector<8x256xf32>
    tpu.vector_store %arg8[%c32, %c0_9], %25 {strides = array<i32>} : memref<72x256xf32, #tpu.memory_space<vmem>>, vector<8x256xf32>,
    %c255_i32 = arith.constant 255 : i32
    %27 = tpu.dynamic_rotate %2 by %c255_i32 dim 1 : vector<8x256xf32>, i32 -> vector<8x256xf32>
    %28 = vector.extract_strided_slice %0 {offsets = [5, 0], sizes = [1, 256], strides = [1, 1]} : vector<9x256xf32> to vector<1x256xf32>
    %29 = vector.broadcast %28 : vector<1x256xf32> to vector<8x256xf32>
    %30 = arith.mulf %27, %29 : vector<8x256xf32>
    %c40 = arith.constant 40 : index
    %c0_10 = arith.constant 0 : index
    %31 = vector.load %arg8[%c40, %c0_10] : memref<72x256xf32, #tpu.memory_space<vmem>>, vector<8x256xf32>
    tpu.vector_store %arg8[%c40, %c0_10], %30 {strides = array<i32>} : memref<72x256xf32, #tpu.memory_space<vmem>>, vector<8x256xf32>,
    %c241_i32 = arith.constant 241 : i32
    %32 = tpu.dynamic_rotate %2 by %c241_i32 dim 1 : vector<8x256xf32>, i32 -> vector<8x256xf32>
    %33 = vector.extract_strided_slice %0 {offsets = [6, 0], sizes = [1, 256], strides = [1, 1]} : vector<9x256xf32> to vector<1x256xf32>
    %34 = vector.broadcast %33 : vector<1x256xf32> to vector<8x256xf32>
    %35 = arith.mulf %32, %34 : vector<8x256xf32>
    %c48 = arith.constant 48 : index
    %c0_11 = arith.constant 0 : index
    %36 = vector.load %arg8[%c48, %c0_11] : memref<72x256xf32, #tpu.memory_space<vmem>>, vector<8x256xf32>
    tpu.vector_store %arg8[%c48, %c0_11], %35 {strides = array<i32>} : memref<72x256xf32, #tpu.memory_space<vmem>>, vector<8x256xf32>,
    %c240_i32 = arith.constant 240 : i32
    %37 = tpu.dynamic_rotate %2 by %c240_i32 dim 1 : vector<8x256xf32>, i32 -> vector<8x256xf32>
    %38 = vector.extract_strided_slice %0 {offsets = [7, 0], sizes = [1, 256], strides = [1, 1]} : vector<9x256xf32> to vector<1x256xf32>
    %39 = vector.broadcast %38 : vector<1x256xf32> to vector<8x256xf32>
    %40 = arith.mulf %37, %39 : vector<8x256xf32>
    %c56 = arith.constant 56 : index
    %c0_12 = arith.constant 0 : index
    %41 = vector.load %arg8[%c56, %c0_12] : memref<72x256xf32, #tpu.memory_space<vmem>>, vector<8x256xf32>
    tpu.vector_store %arg8[%c56, %c0_12], %40 {strides = array<i32>} : memref<72x256xf32, #tpu.memory_space<vmem>>, vector<8x256xf32>,
    %c239_i32 = arith.constant 239 : i32
    %42 = tpu.dynamic_rotate %2 by %c239_i32 dim 1 : vector<8x256xf32>, i32 -> vector<8x256xf32>
    %43 = vector.extract_strided_slice %0 {offsets = [8, 0], sizes = [1, 256], strides = [1, 1]} : vector<9x256xf32> to vector<1x256xf32>
    %44 = vector.broadcast %43 : vector<1x256xf32> to vector<8x256xf32>
    %45 = arith.mulf %42, %44 : vector<8x256xf32>
    %c64 = arith.constant 64 : index
    %c0_13 = arith.constant 0 : index
    %46 = vector.load %arg8[%c64, %c0_13] : memref<72x256xf32, #tpu.memory_space<vmem>>, vector<8x256xf32>
    tpu.vector_store %arg8[%c64, %c0_13], %45 {strides = array<i32>} : memref<72x256xf32, #tpu.memory_space<vmem>>, vector<8x256xf32>,
    %c0_14 = arith.constant 0 : index
    %c0_15 = arith.constant 0 : index
    %47 = vector.load %arg8[%c0_14, %c0_15] : memref<72x256xf32, #tpu.memory_space<vmem>>, vector<72x256xf32>
    %c0_16 = arith.constant 0 : index
    %c0_17 = arith.constant 0 : index
    %48 = vector.load %arg2[%c0_16, %c0_17] : memref<8x72xf32, #tpu.memory_space<vmem>>, vector<8x72xf32>
    %cst = arith.constant dense<0.000000e+00> : vector<8x256xf32>
    %49 = tpu.matmul %48, %47, %cst {dimension_numbers = #tpu.dot_dimension_numbers<[1], [0], [0], [1], [0, 0, 1, 1], [], []>} : vector<8x72xf32>, vector<72x256xf32>, vector<8x256xf32> -> vector<8x256xf32>
    %c0_18 = arith.constant 0 : index
    %c0_19 = arith.constant 0 : index
    %50 = vector.load %arg3[%c0_18, %c0_19] : memref<8x1xf32, #tpu.memory_space<vmem>>, vector<8x1xf32>
    %51 = vector.broadcast %50 : vector<8x1xf32> to vector<8x256xf32>
    %52 = arith.addf %49, %51 : vector<8x256xf32>
    %cst_20 = arith.constant 0.000000e+00 : f32
    %53 = vector.broadcast %cst_20 : f32 to vector<8x256xf32>
    %54 = arith.cmpf ogt, %52, %53 : vector<8x256xf32>
    %cst_21 = arith.constant 0.00999999977 : f32
    %55 = vector.broadcast %cst_21 : f32 to vector<8x256xf32>
    %56 = arith.mulf %55, %52 : vector<8x256xf32>
    %57 = arith.select %54, %52, %56 : vector<8x256xi1>, vector<8x256xf32>
    %c17_i32_22 = arith.constant 17 : i32
    %58 = tpu.dynamic_rotate %57 by %c17_i32_22 dim 1 : vector<8x256xf32>, i32 -> vector<8x256xf32>
    %59 = vector.extract_strided_slice %0 {offsets = [0, 0], sizes = [1, 256], strides = [1, 1]} : vector<9x256xf32> to vector<1x256xf32>
    %60 = vector.broadcast %59 : vector<1x256xf32> to vector<8x256xf32>
    %61 = arith.mulf %58, %60 : vector<8x256xf32>
    %c0_23 = arith.constant 0 : index
    %c0_24 = arith.constant 0 : index
    %62 = vector.load %arg8[%c0_23, %c0_24] : memref<72x256xf32, #tpu.memory_space<vmem>>, vector<8x256xf32>
    tpu.vector_store %arg8[%c0_23, %c0_24], %61 {strides = array<i32>} : memref<72x256xf32, #tpu.memory_space<vmem>>, vector<8x256xf32>,
    %c16_i32_25 = arith.constant 16 : i32
    %63 = tpu.dynamic_rotate %57 by %c16_i32_25 dim 1 : vector<8x256xf32>, i32 -> vector<8x256xf32>
    %64 = vector.extract_strided_slice %0 {offsets = [1, 0], sizes = [1, 256], strides = [1, 1]} : vector<9x256xf32> to vector<1x256xf32>
    %65 = vector.broadcast %64 : vector<1x256xf32> to vector<8x256xf32>
    %66 = arith.mulf %63, %65 : vector<8x256xf32>
    %c8_26 = arith.constant 8 : index
    %c0_27 = arith.constant 0 : index
    %67 = vector.load %arg8[%c8_26, %c0_27] : memref<72x256xf32, #tpu.memory_space<vmem>>, vector<8x256xf32>
    tpu.vector_store %arg8[%c8_26, %c0_27], %66 {strides = array<i32>} : memref<72x256xf32, #tpu.memory_space<vmem>>, vector<8x256xf32>,
    %c15_i32_28 = arith.constant 15 : i32
    %68 = tpu.dynamic_rotate %57 by %c15_i32_28 dim 1 : vector<8x256xf32>, i32 -> vector<8x256xf32>
    %69 = vector.extract_strided_slice %0 {offsets = [2, 0], sizes = [1, 256], strides = [1, 1]} : vector<9x256xf32> to vector<1x256xf32>
    %70 = vector.broadcast %69 : vector<1x256xf32> to vector<8x256xf32>
    %71 = arith.mulf %68, %70 : vector<8x256xf32>
    %c16_29 = arith.constant 16 : index
    %c0_30 = arith.constant 0 : index
    %72 = vector.load %arg8[%c16_29, %c0_30] : memref<72x256xf32, #tpu.memory_space<vmem>>, vector<8x256xf32>
    tpu.vector_store %arg8[%c16_29, %c0_30], %71 {strides = array<i32>} : memref<72x256xf32, #tpu.memory_space<vmem>>, vector<8x256xf32>,
    %c1_i32_31 = arith.constant 1 : i32
    %73 = tpu.dynamic_rotate %57 by %c1_i32_31 dim 1 : vector<8x256xf32>, i32 -> vector<8x256xf32>
    %74 = vector.extract_strided_slice %0 {offsets = [3, 0], sizes = [1, 256], strides = [1, 1]} : vector<9x256xf32> to vector<1x256xf32>
    %75 = vector.broadcast %74 : vector<1x256xf32> to vector<8x256xf32>
    %76 = arith.mulf %73, %75 : vector<8x256xf32>
    %c24_32 = arith.constant 24 : index
    %c0_33 = arith.constant 0 : index
    %77 = vector.load %arg8[%c24_32, %c0_33] : memref<72x256xf32, #tpu.memory_space<vmem>>, vector<8x256xf32>
    tpu.vector_store %arg8[%c24_32, %c0_33], %76 {strides = array<i32>} : memref<72x256xf32, #tpu.memory_space<vmem>>, vector<8x256xf32>,
    %78 = vector.extract_strided_slice %0 {offsets = [4, 0], sizes = [1, 256], strides = [1, 1]} : vector<9x256xf32> to vector<1x256xf32>
    %79 = vector.broadcast %78 : vector<1x256xf32> to vector<8x256xf32>
    %80 = arith.mulf %57, %79 : vector<8x256xf32>
    %c32_34 = arith.constant 32 : index
    %c0_35 = arith.constant 0 : index
    %81 = vector.load %arg8[%c32_34, %c0_35] : memref<72x256xf32, #tpu.memory_space<vmem>>, vector<8x256xf32>
    tpu.vector_store %arg8[%c32_34, %c0_35], %80 {strides = array<i32>} : memref<72x256xf32, #tpu.memory_space<vmem>>, vector<8x256xf32>,
    %c255_i32_36 = arith.constant 255 : i32
    %82 = tpu.dynamic_rotate %57 by %c255_i32_36 dim 1 : vector<8x256xf32>, i32 -> vector<8x256xf32>
    %83 = vector.extract_strided_slice %0 {offsets = [5, 0], sizes = [1, 256], strides = [1, 1]} : vector<9x256xf32> to vector<1x256xf32>
    %84 = vector.broadcast %83 : vector<1x256xf32> to vector<8x256xf32>
    %85 = arith.mulf %82, %84 : vector<8x256xf32>
    %c40_37 = arith.constant 40 : index
    %c0_38 = arith.constant 0 : index
    %86 = vector.load %arg8[%c40_37, %c0_38] : memref<72x256xf32, #tpu.memory_space<vmem>>, vector<8x256xf32>
    tpu.vector_store %arg8[%c40_37, %c0_38], %85 {strides = array<i32>} : memref<72x256xf32, #tpu.memory_space<vmem>>, vector<8x256xf32>,
    %c241_i32_39 = arith.constant 241 : i32
    %87 = tpu.dynamic_rotate %57 by %c241_i32_39 dim 1 : vector<8x256xf32>, i32 -> vector<8x256xf32>
    %88 = vector.extract_strided_slice %0 {offsets = [6, 0], sizes = [1, 256], strides = [1, 1]} : vector<9x256xf32> to vector<1x256xf32>
    %89 = vector.broadcast %88 : vector<1x256xf32> to vector<8x256xf32>
    %90 = arith.mulf %87, %89 : vector<8x256xf32>
    %c48_40 = arith.constant 48 : index
    %c0_41 = arith.constant 0 : index
    %91 = vector.load %arg8[%c48_40, %c0_41] : memref<72x256xf32, #tpu.memory_space<vmem>>, vector<8x256xf32>
    tpu.vector_store %arg8[%c48_40, %c0_41], %90 {strides = array<i32>} : memref<72x256xf32, #tpu.memory_space<vmem>>, vector<8x256xf32>,
    %c240_i32_42 = arith.constant 240 : i32
    %92 = tpu.dynamic_rotate %57 by %c240_i32_42 dim 1 : vector<8x256xf32>, i32 -> vector<8x256xf32>
    %93 = vector.extract_strided_slice %0 {offsets = [7, 0], sizes = [1, 256], strides = [1, 1]} : vector<9x256xf32> to vector<1x256xf32>
    %94 = vector.broadcast %93 : vector<1x256xf32> to vector<8x256xf32>
    %95 = arith.mulf %92, %94 : vector<8x256xf32>
    %c56_43 = arith.constant 56 : index
    %c0_44 = arith.constant 0 : index
    %96 = vector.load %arg8[%c56_43, %c0_44] : memref<72x256xf32, #tpu.memory_space<vmem>>, vector<8x256xf32>
    tpu.vector_store %arg8[%c56_43, %c0_44], %95 {strides = array<i32>} : memref<72x256xf32, #tpu.memory_space<vmem>>, vector<8x256xf32>,
    %c239_i32_45 = arith.constant 239 : i32
    %97 = tpu.dynamic_rotate %57 by %c239_i32_45 dim 1 : vector<8x256xf32>, i32 -> vector<8x256xf32>
    %98 = vector.extract_strided_slice %0 {offsets = [8, 0], sizes = [1, 256], strides = [1, 1]} : vector<9x256xf32> to vector<1x256xf32>
    %99 = vector.broadcast %98 : vector<1x256xf32> to vector<8x256xf32>
    %100 = arith.mulf %97, %99 : vector<8x256xf32>
    %c64_46 = arith.constant 64 : index
    %c0_47 = arith.constant 0 : index
    %101 = vector.load %arg8[%c64_46, %c0_47] : memref<72x256xf32, #tpu.memory_space<vmem>>, vector<8x256xf32>
    tpu.vector_store %arg8[%c64_46, %c0_47], %100 {strides = array<i32>} : memref<72x256xf32, #tpu.memory_space<vmem>>, vector<8x256xf32>,
    %c0_48 = arith.constant 0 : index
    %c0_49 = arith.constant 0 : index
    %102 = vector.load %arg8[%c0_48, %c0_49] : memref<72x256xf32, #tpu.memory_space<vmem>>, vector<72x256xf32>
    %c0_50 = arith.constant 0 : index
    %c0_51 = arith.constant 0 : index
    %103 = vector.load %arg4[%c0_50, %c0_51] : memref<8x72xf32, #tpu.memory_space<vmem>>, vector<8x72xf32>
    %cst_52 = arith.constant dense<0.000000e+00> : vector<8x256xf32>
    %104 = tpu.matmul %103, %102, %cst_52 {dimension_numbers = #tpu.dot_dimension_numbers<[1], [0], [0], [1], [0, 0, 1, 1], [], []>} : vector<8x72xf32>, vector<72x256xf32>, vector<8x256xf32> -> vector<8x256xf32>
    %c0_53 = arith.constant 0 : index
    %c0_54 = arith.constant 0 : index
    %105 = vector.load %arg5[%c0_53, %c0_54] : memref<8x1xf32, #tpu.memory_space<vmem>>, vector<8x1xf32>
    %106 = vector.broadcast %105 : vector<8x1xf32> to vector<8x256xf32>
    %107 = arith.addf %104, %106 : vector<8x256xf32>
    %cst_55 = arith.constant 0.000000e+00 : f32
    %108 = vector.broadcast %cst_55 : f32 to vector<8x256xf32>
    %109 = arith.cmpf ogt, %107, %108 : vector<8x256xf32>
    %cst_56 = arith.constant 0.00999999977 : f32
    %110 = vector.broadcast %cst_56 : f32 to vector<8x256xf32>
    %111 = arith.mulf %110, %107 : vector<8x256xf32>
    %112 = arith.select %109, %107, %111 : vector<8x256xi1>, vector<8x256xf32>
    %c0_57 = arith.constant 0 : index
    %c0_58 = arith.constant 0 : index
    %c0_59 = arith.constant 0 : index
    %113 = vector.load %arg7[%c0_57, %c0_58, %c0_59] : memref<1x8x256xf32, #tpu.memory_space<vmem>>, vector<1x8x256xf32>
    %114 = vector.shape_cast %113 : vector<1x8x256xf32> to vector<8x256xf32>
    %115 = vector.shape_cast %112 : vector<8x256xf32> to vector<1x8x256xf32>
    tpu.vector_store %arg7[%c0_57, %c0_58, %c0_59], %115 {strides = array<i32>} : memref<1x8x256xf32, #tpu.memory_space<vmem>>, vector<1x8x256xf32>,
    return
  }
  func.func @transform_0(%arg0: i32) -> (i32, i32, i32) {
    %c0_i32 = arith.constant 0 : i32
    %c0_i32_0 = arith.constant 0 : i32
    %c0_i32_1 = arith.constant 0 : i32
    return %arg0, %c0_i32, %c0_i32_0 : i32, i32, i32
  }
  func.func @transform_1(%arg0: i32) -> (i32, i32) {
    %c0_i32 = arith.constant 0 : i32
    %c0_i32_0 = arith.constant 0 : i32
    %c0_i32_1 = arith.constant 0 : i32
    return %c0_i32, %c0_i32_0 : i32, i32
  }
  func.func @transform_2(%arg0: i32) -> (i32, i32) {
    %c0_i32 = arith.constant 0 : i32
    %c0_i32_0 = arith.constant 0 : i32
    %c0_i32_1 = arith.constant 0 : i32
    return %c0_i32, %c0_i32_0 : i32, i32
  }
  func.func @transform_3(%arg0: i32) -> (i32, i32) {
    %c0_i32 = arith.constant 0 : i32
    %c0_i32_0 = arith.constant 0 : i32
    %c0_i32_1 = arith.constant 0 : i32
    return %c0_i32, %c0_i32_0 : i32, i32
  }
  func.func @transform_4(%arg0: i32) -> (i32, i32) {
    %c0_i32 = arith.constant 0 : i32
    %c0_i32_0 = arith.constant 0 : i32
    %c0_i32_1 = arith.constant 0 : i32
    return %c0_i32, %c0_i32_0 : i32, i32
  }
  func.func @transform_5(%arg0: i32) -> (i32, i32) {
    %c0_i32 = arith.constant 0 : i32
    %c0_i32_0 = arith.constant 0 : i32
    %c0_i32_1 = arith.constant 0 : i32
    return %c0_i32, %c0_i32_0 : i32, i32
  }
  func.func @transform_6(%arg0: i32) -> (i32, i32, i32) {
    %c0_i32 = arith.constant 0 : i32
    %c0_i32_0 = arith.constant 0 : i32
    %c0_i32_1 = arith.constant 0 : i32
    return %arg0, %c0_i32, %c0_i32_0 : i32, i32, i32
  }
}

</mosaic_0001>

<llo_original>
// kernel: _double_conv01_forward.1
$region0: #{_double_conv01_forward.1}
  #allocation0 [shape = 'u32[]', space=smem, size = 0x4, offset = 0x4, fixed_abs, tag = 'smem constant byte address 0x4 - core index']
  #allocation1 [shape = 'u32[72,128]{1,0:T(1,128)}', space=vmem, size = 0x9000, scoped, tag = 'internal scratch']
  #allocation2 [shape = 'f32[72,256]{1,0:T(8,128)}', space=vmem, size = 0x12000, scoped, tag = 'scratch operand']
  %s0 = inlined_call_operand.vmem [shape: f32[2,8,256], index: 0, kind: input, shape index: {}]
  %s1 = inlined_call_operand.vmem [shape: f32[8,72], index: 1, kind: input, shape index: {}]
  %s2 = inlined_call_operand.vmem [shape: f32[8,1], index: 2, kind: input, shape index: {}]
  %s3 = inlined_call_operand.vmem [shape: f32[8,72], index: 3, kind: input, shape index: {}]
  %s4 = inlined_call_operand.vmem [shape: f32[8,1], index: 4, kind: input, shape index: {}]
  %s5 = inlined_call_operand.vmem [shape: f32[9,256], index: 5, kind: input, shape index: {}]
  %s6 = inlined_call_operand.vmem [shape: f32[2,8,256], index: 6, kind: output, shape index: {}]
  %s7 = sld [smem:[#allocation0]]
  $region57: #{_double_conv01_forward.1} parent=0
    _
  %s9 = ssub.s32 1, %s7
  %s10 = scalar_select 0, %s9, %s7
  loop: start=0, step=1, limit=4
  $region2: #{_double_conv01_forward.1} parent=0 // loop_pre_header
    _
  $region3: #{_double_conv01_forward.1} parent=0 // loop_header
    %s12 = sphi 0, %s16
    %p13 = scmp.ge.s32.totalorder %s12, 4
    %s22 = sphi 0, %s24
    %s25 = sphi 0, %s22
    %s26 = sphi 0, %s25
    %s42 = sphi 0, %s26
    %s46 = sphi 0, %s46
    %s48 = sphi 0, %s46
    %s49 = sphi 0, %s48
    %s63 = sphi 0, %s49
    %s67 = sphi 0, %s67
    %s69 = sphi 0, %s67
    %s70 = sphi 0, %s69
    %s84 = sphi 0, %s70
    %s88 = sphi 0, %s88
    %s90 = sphi 0, %s88
    %s91 = sphi 0, %s90
    %s105 = sphi 0, %s91
    %s109 = sphi 0, %s109
    %s111 = sphi 0, %s109
    %s112 = sphi 0, %s111
    %s126 = sphi 0, %s112
    %s130 = sphi 0, %s130
    %s132 = sphi 0, %s130
    %s133 = sphi 0, %s132
    %s147 = sphi 0, %s133
    %s153 = sphi 0, %s155
    %s156 = sphi 0, %s153
    %s157 = sphi 0, %s156
    %s173 = sphi 0, %s157
  $region4: #{_double_conv01_forward.1} parent=0 // loop_header_branch
    %15 = sbr.rel (%p13) target = $region8
  $region5: #{_double_conv01_forward.1} parent=0 // loop_body
    %s17 = ssub.s32 %s12, 1
    %s18 = ssub.s32 %s12, 2
    %s19 = sadd.s32 %s12, 1
    %s20 = ssub.s32 %s12, %s19
    %p21 = scmp.eq.s32.totalorder %s20, 0
    %s23 = sadd.s32 %s22, 1
    %s24 = scalar_select %p21, %s22, %s23
    %p27 = pneg %p21
    %p28 = scmp.eq.s32.totalorder %s12, 1
    %p29 = por %p27, %p28
    %p30 = scmp.ne.s32.totalorder %s22, %s25
    %p31 = scmp.eq.s32.totalorder %s12, 0
    %p32 = por %p30, %p31
    %p33 = scmp.ne.s32.totalorder %s22, %s25
    %p34 = scmp.eq.s32.totalorder %s17, 1
    %p35 = por %p33, %p34
    %p36 = scmp.ne.s32.totalorder %s25, %s26
    %p37 = scmp.eq.s32.totalorder %s17, 0
    %p38 = por %p36, %p37
    %p39 = scmp.ne.s32.totalorder %s25, %s26
    %p40 = scmp.eq.s32.totalorder %s18, 1
    %p41 = por %p39, %p40
    %p43 = scmp.ne.s32.totalorder %s26, %s42
    %p44 = scmp.eq.s32.totalorder %s18, 0
    %p45 = por %p43, %p44
    %s47 = sadd.s32 %s46, 1
    %p50 = scmp.eq.s32.totalorder %s12, 1
    %p51 = scmp.ne.s32.totalorder %s46, %s48
    %p52 = scmp.eq.s32.totalorder %s12, 0
    %p53 = por %p51, %p52
    %p54 = scmp.ne.s32.totalorder %s46, %s48
    %p55 = scmp.eq.s32.totalorder %s17, 1
    %p56 = por %p54, %p55
    %p57 = scmp.ne.s32.totalorder %s48, %s49
    %p58 = scmp.eq.s32.totalorder %s17, 0
    %p59 = por %p57, %p58
    %p60 = scmp.ne.s32.totalorder %s48, %s49
    %p61 = scmp.eq.s32.totalorder %s18, 1
    %p62 = por %p60, %p61
    %p64 = scmp.ne.s32.totalorder %s49, %s63
    %p65 = scmp.eq.s32.totalorder %s18, 0
    %p66 = por %p64, %p65
    %s68 = sadd.s32 %s67, 1
    %p71 = scmp.eq.s32.totalorder %s12, 1
    %p72 = scmp.ne.s32.totalorder %s67, %s69
    %p73 = scmp.eq.s32.totalorder %s12, 0
    %p74 = por %p72, %p73
    %p75 = scmp.ne.s32.totalorder %s67, %s69
    %p76 = scmp.eq.s32.totalorder %s17, 1
    %p77 = por %p75, %p76
    %p78 = scmp.ne.s32.totalorder %s69, %s70
    %p79 = scmp.eq.s32.totalorder %s17, 0
    %p80 = por %p78, %p79
    %p81 = scmp.ne.s32.totalorder %s69, %s70
    %p82 = scmp.eq.s32.totalorder %s18, 1
    %p83 = por %p81, %p82
    %p85 = scmp.ne.s32.totalorder %s70, %s84
    %p86 = scmp.eq.s32.totalorder %s18, 0
    %p87 = por %p85, %p86
    %s89 = sadd.s32 %s88, 1
    %p92 = scmp.eq.s32.totalorder %s12, 1
    %p93 = scmp.ne.s32.totalorder %s88, %s90
    %p94 = scmp.eq.s32.totalorder %s12, 0
    %p95 = por %p93, %p94
    %p96 = scmp.ne.s32.totalorder %s88, %s90
    %p97 = scmp.eq.s32.totalorder %s17, 1
    %p98 = por %p96, %p97
    %p99 = scmp.ne.s32.totalorder %s90, %s91
    %p100 = scmp.eq.s32.totalorder %s17, 0
    %p101 = por %p99, %p100
    %p102 = scmp.ne.s32.totalorder %s90, %s91
    %p103 = scmp.eq.s32.totalorder %s18, 1
    %p104 = por %p102, %p103
    %p106 = scmp.ne.s32.totalorder %s91, %s105
    %p107 = scmp.eq.s32.totalorder %s18, 0
    %p108 = por %p106, %p107
    %s110 = sadd.s32 %s109, 1
    %p113 = scmp.eq.s32.totalorder %s12, 1
    %p114 = scmp.ne.s32.totalorder %s109, %s111
    %p115 = scmp.eq.s32.totalorder %s12, 0
    %p116 = por %p114, %p115
    %p117 = scmp.ne.s32.totalorder %s109, %s111
    %p118 = scmp.eq.s32.totalorder %s17, 1
    %p119 = por %p117, %p118
    %p120 = scmp.ne.s32.totalorder %s111, %s112
    %p121 = scmp.eq.s32.totalorder %s17, 0
    %p122 = por %p120, %p121
    %p123 = scmp.ne.s32.totalorder %s111, %s112
    %p124 = scmp.eq.s32.totalorder %s18, 1
    %p125 = por %p123, %p124
    %p127 = scmp.ne.s32.totalorder %s112, %s126
    %p128 = scmp.eq.s32.totalorder %s18, 0
    %p129 = por %p127, %p128
    %s131 = sadd.s32 %s130, 1
    %p134 = scmp.eq.s32.totalorder %s12, 1
    %p135 = scmp.ne.s32.totalorder %s130, %s132
    %p136 = scmp.eq.s32.totalorder %s12, 0
    %p137 = por %p135, %p136
    %p138 = scmp.ne.s32.totalorder %s130, %s132
    %p139 = scmp.eq.s32.totalorder %s17, 1
    %p140 = por %p138, %p139
    %p141 = scmp.ne.s32.totalorder %s132, %s133
    %p142 = scmp.eq.s32.totalorder %s17, 0
    %p143 = por %p141, %p142
    %p144 = scmp.ne.s32.totalorder %s132, %s133
    %p145 = scmp.eq.s32.totalorder %s18, 1
    %p146 = por %p144, %p145
    %p148 = scmp.ne.s32.totalorder %s133, %s147
    %p149 = scmp.eq.s32.totalorder %s18, 0
    %p150 = por %p148, %p149
    %s151 = ssub.s32 %s12, %s19
    %p152 = scmp.eq.s32.totalorder %s151, 0
    %s154 = sadd.s32 %s153, 1
    %s155 = scalar_select %p152, %s153, %s154
    %p158 = pneg %p152
    %p159 = scmp.eq.s32.totalorder %s12, 1
    %p160 = por %p158, %p159
    %p161 = scmp.ne.s32.totalorder %s153, %s156
    %p162 = scmp.eq.s32.totalorder %s12, 0
    %p163 = por %p161, %p162
    %p164 = scmp.ne.s32.totalorder %s153, %s156
    %p165 = scmp.eq.s32.totalorder %s17, 1
    %p166 = por %p164, %p165
    %p167 = scmp.ne.s32.totalorder %s156, %s157
    %p168 = scmp.eq.s32.totalorder %s17, 0
    %p169 = por %p167, %p168
    %p170 = scmp.ne.s32.totalorder %s156, %s157
    %p171 = scmp.eq.s32.totalorder %s18, 1
    %p172 = por %p170, %p171
    %p174 = scmp.ne.s32.totalorder %s157, %s173
    %p175 = scmp.eq.s32.totalorder %s18, 0
    %p176 = por %p174, %p175
    %p177 = scmp.le.s32.totalorder 1, %s12
    %p178 = scmp.lt.s32.totalorder %s12, 3
    %p179 = pnand %p177, %p178
    %p180 = pneg %p179
    // Predicated region
    $region9: #{_double_conv01_forward.1} parent=5 // pred_check
      _
    $region10: #{_double_conv01_forward.1} parent=5 // pred_check_branch
      %182 = sbr.rel (%p179) target = $region12
    $region11: #{_double_conv01_forward.1} parent=5 // pred_region
      %s183 = ssub.s32 %s12, 1
      // Predicated region
      $region13: #{_double_conv01_forward.1} parent=11 // pred_check
        %p184 = pneg %p59
      $region14: #{_double_conv01_forward.1} parent=11 // pred_check_branch
        %186 = sbr.rel (%p184) target = $region16
      $region15: #{_double_conv01_forward.1} parent=11 // pred_region
        _
      $region16: #{_double_conv01_forward.1} parent=11 // pred_fallthru
        _
      // Predicated region
      $region17: #{_double_conv01_forward.1} parent=11 // pred_check
        %p187 = pneg %p80
      $region18: #{_double_conv01_forward.1} parent=11 // pred_check_branch
        %189 = sbr.rel (%p187) target = $region20
      $region19: #{_double_conv01_forward.1} parent=11 // pred_region
        _
      $region20: #{_double_conv01_forward.1} parent=11 // pred_fallthru
        _
      // Predicated region
      $region21: #{_double_conv01_forward.1} parent=11 // pred_check
        %p190 = pneg %p101
      $region22: #{_double_conv01_forward.1} parent=11 // pred_check_branch
        %192 = sbr.rel (%p190) target = $region24
      $region23: #{_double_conv01_forward.1} parent=11 // pred_region
        _
      $region24: #{_double_conv01_forward.1} parent=11 // pred_fallthru
        _
      // Predicated region
      $region25: #{_double_conv01_forward.1} parent=11 // pred_check
        %p193 = pneg %p122
      $region26: #{_double_conv01_forward.1} parent=11 // pred_check_branch
        %195 = sbr.rel (%p193) target = $region28
      $region27: #{_double_conv01_forward.1} parent=11 // pred_region
        _
      $region28: #{_double_conv01_forward.1} parent=11 // pred_fallthru
        _
      // Predicated region
      $region29: #{_double_conv01_forward.1} parent=11 // pred_check
        %p196 = pneg %p143
      $region30: #{_double_conv01_forward.1} parent=11 // pred_check_branch
        %198 = sbr.rel (%p196) target = $region32
      $region31: #{_double_conv01_forward.1} parent=11 // pred_region
        _
      $region32: #{_double_conv01_forward.1} parent=11 // pred_fallthru
        _
    $region12: #{_double_conv01_forward.1} parent=5 // pred_fallthru
      _
    %p199 = scmp.lt.s32.totalorder %s12, 2
    // Predicated region
    $region33: #{_double_conv01_forward.1} parent=5 // pred_check
      %p200 = pneg %p199
    $region34: #{_double_conv01_forward.1} parent=5 // pred_check_branch
      %202 = sbr.rel (%p200) target = $region36
    $region35: #{_double_conv01_forward.1} parent=5 // pred_region
      // Predicated region
      $region37: #{_double_conv01_forward.1} parent=35 // pred_check
        %p203 = pneg %p32
      $region38: #{_double_conv01_forward.1} parent=35 // pred_check_branch
        %205 = sbr.rel (%p203) target = $region40
      $region39: #{_double_conv01_forward.1} parent=35 // pred_region
        %p206 = scmp.lt.s32.totalorder %s12, 1
        %s207 = scalar_select %p206, %s12, 1
        %s208 = smul.addr %s207, 2
        %s209 = smul.addr %s208, 8
        %s210 = scalar_lea.vmem %s0, %s209
      $region40: #{_double_conv01_forward.1} parent=35 // pred_fallthru
        _
    $region36: #{_double_conv01_forward.1} parent=5 // pred_fallthru
      _
    %p211 = scmp.le.s32.totalorder 1, %s12
    %p212 = scmp.lt.s32.totalorder %s12, 3
    %p213 = pnand %p211, %p212
    %p214 = pneg %p213
    // Predicated region
    $region41: #{_double_conv01_forward.1} parent=5 // pred_check
      _
    $region42: #{_double_conv01_forward.1} parent=5 // pred_check_branch
      %216 = sbr.rel (%p213) target = $region44
    $region43: #{_double_conv01_forward.1} parent=5 // pred_region
      %s217 = ssub.s32 %s12, 1
      %p218 = scmp.lt.s32.totalorder %s17, 1
      %s219 = scalar_select %p218, %s17, 1
      %s220 = smul.addr %s219, 2
      %s221 = smul.addr %s220, 8
      %s222 = scalar_lea.vmem %s0, %s221
      %p223 = pneg %p38
      %p224 = pneg %p35
      %p225 = pneg %p59
      %p226 = pneg %p56
      %p227 = pneg %p80
      %p228 = pneg %p77
      %p229 = pneg %p101
      %p230 = pneg %p98
      %p231 = pneg %p122
      %p232 = pneg %p119
      %p233 = pneg %p143
      %p234 = pneg %p140
      %p235 = pneg %p169
      %p236 = pneg %p166
      %p237 = scmp.lt.s32.totalorder %s17, 1
      %s238 = scalar_select %p237, %s17, 1
      %s239 = smul.addr %s238, 2
      %s240 = smul.addr %s239, 8
      %s241 = scalar_lea.vmem %s6, %s240
      %p242 = scmp.lt.s32.totalorder %s17, 1
      %s243 = scalar_select %p242, %s17, 1
      %s244 = smul.addr %s243, 2
      %s245 = smul.addr %s244, 8
      %s246 = scalar_lea.vmem %s0, %s245
      %p247 = scmp.lt.s32.totalorder %s17, 1
      %s248 = scalar_select %p247, %s17, 1
      %s249 = smul.addr %s248, 2
      %s250 = smul.addr %s249, 8
      %s251 = scalar_lea.vmem %s6, %s250
      %v252 = vld [vmem:[%s5] sm:$0xff]
      %v253 = vld [vmem:[%s5 + $0x8] sm:$0xff]
      %v254 = vld [vmem:[%s5 + $0x10] sm:$0x1]
      %v255 = vld [vmem:[%s5 + $0x18] sm:$0x1]
      %v256 = vld [vmem:[%s246] sm:$0xff]
      %v257 = vld [vmem:[%s246 + $0x8] sm:$0xff]
      %258 = vrot.lane.b32.xlu0 %v256, 17
      %v259 = vpop.permute.xlu0 %258
      %260 = vrot.lane.b32.xlu0 %v257, 17
      %v261 = vpop.permute.xlu0 %260
      %v262 = vlaneseq
      %v263 = vand.u32 %v262, 127
      %vm264 = vcmp.lt.s32.totalorder %v263, 17
      %v265 = vsel %vm264, %v259, %v261
      %v266 = vsel %vm264, %v261, %v259
      %v267 = vperm.slane %v252, 0
      %v268 = vperm.slane %v253, 0
      %v269 = vmul.f32 %v266, %v267
      %v270 = vmul.f32 %v265, %v268
      %271 = vst [vmem:[#allocation2] sm:$0xff] %v269
      %272 = vst [vmem:[#allocation2 + $0x8] sm:$0xff] %v270
      %273 = vrot.lane.b32.xlu0 %v256, 16
      %v274 = vpop.permute.xlu0 %273
      %275 = vrot.lane.b32.xlu0 %v257, 16
      %v276 = vpop.permute.xlu0 %275
      %vm277 = vcmp.lt.s32.totalorder %v263, 16
      %v278 = vsel %vm277, %v274, %v276
      %v279 = vsel %vm277, %v276, %v274
      %v280 = vperm.slane %v252, 1
      %v281 = vperm.slane %v253, 1
      %v282 = vmul.f32 %v279, %v280
      %v283 = vmul.f32 %v278, %v281
      %284 = vst [vmem:[#allocation2 + $0x10] sm:$0xff] %v282
      %285 = vst [vmem:[#allocation2 + $0x18] sm:$0xff] %v283
      %286 = vrot.lane.b32.xlu0 %v256, 15
      %v287 = vpop.permute.xlu0 %286
      %288 = vrot.lane.b32.xlu0 %v257, 15
      %v289 = vpop.permute.xlu0 %288
      %vm290 = vcmp.lt.s32.totalorder %v263, 15
      %v291 = vsel %vm290, %v287, %v289
      %v292 = vsel %vm290, %v289, %v287
      %v293 = vperm.slane %v252, 2
      %v294 = vperm.slane %v253, 2
      %v295 = vmul.f32 %v292, %v293
      %v296 = vmul.f32 %v291, %v294
      %297 = vst [vmem:[#allocation2 + $0x20] sm:$0xff] %v295
      %298 = vst [vmem:[#allocation2 + $0x28] sm:$0xff] %v296
      %299 = vrot.lane.b32.xlu0 %v256, 1
      %v300 = vpop.permute.xlu0 %299
      %301 = vrot.lane.b32.xlu0 %v257, 1
      %v302 = vpop.permute.xlu0 %301
      %vm303 = vcmp.lt.s32.totalorder %v263, 1
      %v304 = vsel %vm303, %v300, %v302
      %v305 = vsel %vm303, %v302, %v300
      %v306 = vperm.slane %v252, 3
      %v307 = vperm.slane %v253, 3
      %v308 = vmul.f32 %v305, %v306
      %v309 = vmul.f32 %v304, %v307
      %310 = vst [vmem:[#allocation2 + $0x30] sm:$0xff] %v308
      %311 = vst [vmem:[#allocation2 + $0x38] sm:$0xff] %v309
      %v312 = vperm.slane %v252, 4
      %v313 = vperm.slane %v253, 4
      %v314 = vmul.f32 %v256, %v312
      %v315 = vmul.f32 %v257, %v313
      %316 = vst [vmem:[#allocation2 + $0x40] sm:$0xff] %v314
      %317 = vst [vmem:[#allocation2 + $0x48] sm:$0xff] %v315
      %318 = vrot.lane.b32.xlu0 %v256, 127
      %v319 = vpop.permute.xlu0 %318
      %320 = vrot.lane.b32.xlu0 %v257, 127
      %v321 = vpop.permute.xlu0 %320
      %vm322 = vcmp.lt.s32.totalorder %v263, 127
      %v323 = vsel %vm322, %v319, %v321
      %v324 = vsel %vm322, %v321, %v319
      %v325 = vperm.slane %v252, 5
      %v326 = vperm.slane %v253, 5
      %v327 = vmul.f32 %v323, %v325
      %v328 = vmul.f32 %v324, %v326
      %329 = vst [vmem:[#allocation2 + $0x50] sm:$0xff] %v327
      %330 = vst [vmem:[#allocation2 + $0x58] sm:$0xff] %v328
      %331 = vrot.lane.b32.xlu0 %v256, 113
      %v332 = vpop.permute.xlu0 %331
      %333 = vrot.lane.b32.xlu0 %v257, 113
      %v334 = vpop.permute.xlu0 %333
      %vm335 = vcmp.lt.s32.totalorder %v263, 113
      %v336 = vsel %vm335, %v332, %v334
      %v337 = vsel %vm335, %v334, %v332
      %v338 = vperm.slane %v252, 6
      %v339 = vperm.slane %v253, 6
      %v340 = vmul.f32 %v336, %v338
      %v341 = vmul.f32 %v337, %v339
      %342 = vst [vmem:[#allocation2 + $0x60] sm:$0xff] %v340
      %343 = vst [vmem:[#allocation2 + $0x68] sm:$0xff] %v341
      %344 = vrot.lane.b32.xlu0 %v256, 112
      %v345 = vpop.permute.xlu0 %344
      %346 = vrot.lane.b32.xlu0 %v257, 112
      %v347 = vpop.permute.xlu0 %346
      %vm348 = vcmp.lt.s32.totalorder %v263, 112
      %v349 = vsel %vm348, %v345, %v347
      %v350 = vsel %vm348, %v347, %v345
      %v351 = vperm.slane %v252, 7
      %v352 = vperm.slane %v253, 7
      %v353 = vmul.f32 %v349, %v351
      %v354 = vmul.f32 %v350, %v352
      %355 = vst [vmem:[#allocation2 + $0x70] sm:$0xff] %v353
      %356 = vst [vmem:[#allocation2 + $0x78] sm:$0xff] %v354
      %357 = vrot.lane.b32.xlu0 %v256, 111
      %v358 = vpop.permute.xlu0 %357
      %359 = vrot.lane.b32.xlu0 %v257, 111
      %v360 = vpop.permute.xlu0 %359
      %vm361 = vcmp.lt.s32.totalorder %v263, 111
      %v362 = vsel %vm361, %v358, %v360
      %v363 = vsel %vm361, %v360, %v358
      %v364 = vperm.slane %v254, 0
      %v365 = vperm.slane %v255, 0
      %v366 = vmul.f32 %v362, %v364
      %v367 = vmul.f32 %v363, %v365
      %368 = vst [vmem:[#allocation2 + $0x80] sm:$0xff] %v366
      %369 = vst [vmem:[#allocation2 + $0x88] sm:$0xff] %v367
      %v370 = vld [vmem:[#allocation2] sm:$0xff]
      %v371 = vld [vmem:[#allocation2 + $0x8] sm:$0xff]
      %v372 = vld [vmem:[#allocation2 + $0x10] sm:$0xff]
      %v373 = vld [vmem:[#allocation2 + $0x18] sm:$0xff]
      %v374 = vld [vmem:[#allocation2 + $0x20] sm:$0xff]
      %v375 = vld [vmem:[#allocation2 + $0x28] sm:$0xff]
      %v376 = vld [vmem:[#allocation2 + $0x30] sm:$0xff]
      %v377 = vld [vmem:[#allocation2 + $0x38] sm:$0xff]
      %v378 = vld [vmem:[#allocation2 + $0x40] sm:$0xff]
      %v379 = vld [vmem:[#allocation2 + $0x48] sm:$0xff]
      %v380 = vld [vmem:[#allocation2 + $0x50] sm:$0xff]
      %v381 = vld [vmem:[#allocation2 + $0x58] sm:$0xff]
      %v382 = vld [vmem:[#allocation2 + $0x60] sm:$0xff]
      %v383 = vld [vmem:[#allocation2 + $0x68] sm:$0xff]
      %v384 = vld [vmem:[#allocation2 + $0x70] sm:$0xff]
      %v385 = vld [vmem:[#allocation2 + $0x78] sm:$0xff]
      %v386 = vld [vmem:[#allocation2 + $0x80] sm:$0xff]
      %v387 = vld [vmem:[#allocation2 + $0x88] sm:$0xff]
      %v388 = vld [vmem:[%s1] sm:$0xff]
      %v389 = vld [vmem:[%s2] sm:$0xff]
      %391 = vset.pattern.permute.xlu0 0
      %392 = vperm.xlu0 %391, %v389
      %v393 = vpop.permute.xlu0 %392
      %vm395 = vcmask 588800
      %v397 = vsel %vm395, %v388, 0
      %399 = vmatpush.msra.mxu0 0.0
      %400 = vmatpush.msra.mxu0 0.0
      %401 = vmatpush.msra.mxu0 0.0
      %402 = vmatpush.msra.mxu0 0.0
      %403 = vmatpush.msra.mxu0 0.0
      %404 = vmatpush.msra.mxu0 0.0
      %405 = vmatpush.msra.mxu0 0.0
      %406 = vmatpush.msra.mxu0 %v386
      %407 = vmatpush.msra.mxu0 %v384
      %408 = vmatpush.msra.mxu0 %v382
      %409 = vmatpush.msra.mxu0 %v380
      %410 = vmatpush.msra.mxu0 %v378
      %411 = vmatpush.msra.mxu0 %v376
      %412 = vmatpush.msra.mxu0 %v374
      %413 = vmatpush.msra.mxu0 %v372
      %414 = vmatpush.msra.mxu0 %v370
      %415 = vmatmul.f32.gmra.mxu0 %v397
      %v416 = vpop.f32.mrf.mxu0
      %v417 = vadd.f32 %v393, %v416
      %418 = vdwg.mxu0
      %419 = vmatpush.msra.mxu0 0.0
      %420 = vmatpush.msra.mxu0 0.0
      %421 = vmatpush.msra.mxu0 0.0
      %422 = vmatpush.msra.mxu0 0.0
      %423 = vmatpush.msra.mxu0 0.0
      %424 = vmatpush.msra.mxu0 0.0
      %425 = vmatpush.msra.mxu0 0.0
      %426 = vmatpush.msra.mxu0 %v387
      %427 = vmatpush.msra.mxu0 %v385
      %428 = vmatpush.msra.mxu0 %v383
      %429 = vmatpush.msra.mxu0 %v381
      %430 = vmatpush.msra.mxu0 %v379
      %431 = vmatpush.msra.mxu0 %v377
      %432 = vmatpush.msra.mxu0 %v375
      %433 = vmatpush.msra.mxu0 %v373
      %434 = vmatpush.msra.mxu0 %v371
      %435 = vmatmul.f32.gmra.mxu0 %v397
      %v436 = vpop.f32.mrf.mxu0
      %v437 = vadd.f32 %v393, %v436
      %438 = vdwg.mxu0
      %vm439 = vcmp.gt.f32.partialorder %v417, 0.0
      %vm440 = vcmp.gt.f32.partialorder %v437, 0.0
      %v441 = vmul.f32 %v417, 0.01
      %v442 = vmul.f32 %v437, 0.01
      %v443 = vsel %vm439, %v417, %v441
      %v444 = vsel %vm440, %v437, %v442
      %445 = vrot.lane.b32.xlu0 %v443, 17
      %v446 = vpop.permute.xlu0 %445
      %447 = vrot.lane.b32.xlu0 %v444, 17
      %v448 = vpop.permute.xlu0 %447
      %v449 = vsel %vm264, %v446, %v448
      %v450 = vsel %vm264, %v448, %v446
      %v451 = vmul.f32 %v450, %v267
      %v452 = vmul.f32 %v449, %v268
      %453 = vst [vmem:[#allocation2] sm:$0xff] %v451
      %454 = vst [vmem:[#allocation2 + $0x8] sm:$0xff] %v452
      %455 = vrot.lane.b32.xlu0 %v443, 16
      %v456 = vpop.permute.xlu0 %455
      %457 = vrot.lane.b32.xlu0 %v444, 16
      %v458 = vpop.permute.xlu0 %457
      %v459 = vsel %vm277, %v456, %v458
      %v460 = vsel %vm277, %v458, %v456
      %v461 = vmul.f32 %v460, %v280
      %v462 = vmul.f32 %v459, %v281
      %463 = vst [vmem:[#allocation2 + $0x10] sm:$0xff] %v461
      %464 = vst [vmem:[#allocation2 + $0x18] sm:$0xff] %v462
      %465 = vrot.lane.b32.xlu0 %v443, 15
      %v466 = vpop.permute.xlu0 %465
      %467 = vrot.lane.b32.xlu0 %v444, 15
      %v468 = vpop.permute.xlu0 %467
      %v469 = vsel %vm290, %v466, %v468
      %v470 = vsel %vm290, %v468, %v466
      %v471 = vmul.f32 %v470, %v293
      %v472 = vmul.f32 %v469, %v294
      %473 = vst [vmem:[#allocation2 + $0x20] sm:$0xff] %v471
      %474 = vst [vmem:[#allocation2 + $0x28] sm:$0xff] %v472
      %475 = vrot.lane.b32.xlu0 %v443, 1
      %v476 = vpop.permute.xlu0 %475
      %477 = vrot.lane.b32.xlu0 %v444, 1
      %v478 = vpop.permute.xlu0 %477
      %v479 = vsel %vm303, %v476, %v478
      %v480 = vsel %vm303, %v478, %v476
      %v481 = vmul.f32 %v480, %v306
      %v482 = vmul.f32 %v479, %v307
      %483 = vst [vmem:[#allocation2 + $0x30] sm:$0xff] %v481
      %484 = vst [vmem:[#allocation2 + $0x38] sm:$0xff] %v482
      %v485 = vmul.f32 %v443, %v312
      %v486 = vmul.f32 %v444, %v313
      %487 = vst [vmem:[#allocation2 + $0x40] sm:$0xff] %v485
      %488 = vst [vmem:[#allocation2 + $0x48] sm:$0xff] %v486
      %489 = vrot.lane.b32.xlu0 %v443, 127
      %v490 = vpop.permute.xlu0 %489
      %491 = vrot.lane.b32.xlu0 %v444, 127
      %v492 = vpop.permute.xlu0 %491
      %v493 = vsel %vm322, %v490, %v492
      %v494 = vsel %vm322, %v492, %v490
      %v495 = vmul.f32 %v493, %v325
      %v496 = vmul.f32 %v494, %v326
      %497 = vst [vmem:[#allocation2 + $0x50] sm:$0xff] %v495
      %498 = vst [vmem:[#allocation2 + $0x58] sm:$0xff] %v496
      %499 = vrot.lane.b32.xlu0 %v443, 113
      %v500 = vpop.permute.xlu0 %499
      %501 = vrot.lane.b32.xlu0 %v444, 113
      %v502 = vpop.permute.xlu0 %501
      %v503 = vsel %vm335, %v500, %v502
      %v504 = vsel %vm335, %v502, %v500
      %v505 = vmul.f32 %v503, %v338
      %v506 = vmul.f32 %v504, %v339
      %507 = vst [vmem:[#allocation2 + $0x60] sm:$0xff] %v505
      %508 = vst [vmem:[#allocation2 + $0x68] sm:$0xff] %v506
      %509 = vrot.lane.b32.xlu0 %v443, 112
      %v510 = vpop.permute.xlu0 %509
      %511 = vrot.lane.b32.xlu0 %v444, 112
      %v512 = vpop.permute.xlu0 %511
      %v513 = vsel %vm348, %v510, %v512
      %v514 = vsel %vm348, %v512, %v510
      %v515 = vmul.f32 %v513, %v351
      %v516 = vmul.f32 %v514, %v352
      %517 = vst [vmem:[#allocation2 + $0x70] sm:$0xff] %v515
      %518 = vst [vmem:[#allocation2 + $0x78] sm:$0xff] %v516
      %519 = vrot.lane.b32.xlu0 %v443, 111
      %v520 = vpop.permute.xlu0 %519
      %521 = vrot.lane.b32.xlu0 %v444, 111
      %v522 = vpop.permute.xlu0 %521
      %v523 = vsel %vm361, %v520, %v522
      %v524 = vsel %vm361, %v522, %v520
      %v525 = vmul.f32 %v523, %v364
      %v526 = vmul.f32 %v524, %v365
      %527 = vst [vmem:[#allocation2 + $0x80] sm:$0xff] %v525
      %528 = vst [vmem:[#allocation2 + $0x88] sm:$0xff] %v526
      %v529 = vld [vmem:[#allocation2] sm:$0xff]
      %v530 = vld [vmem:[#allocation2 + $0x8] sm:$0xff]
      %v531 = vld [vmem:[#allocation2 + $0x10] sm:$0xff]
      %v532 = vld [vmem:[#allocation2 + $0x18] sm:$0xff]
      %v533 = vld [vmem:[#allocation2 + $0x20] sm:$0xff]
      %v534 = vld [vmem:[#allocation2 + $0x28] sm:$0xff]
      %v535 = vld [vmem:[#allocation2 + $0x30] sm:$0xff]
      %v536 = vld [vmem:[#allocation2 + $0x38] sm:$0xff]
      %v537 = vld [vmem:[#allocation2 + $0x40] sm:$0xff]
      %v538 = vld [vmem:[#allocation2 + $0x48] sm:$0xff]
      %v539 = vld [vmem:[#allocation2 + $0x50] sm:$0xff]
      %v540 = vld [vmem:[#allocation2 + $0x58] sm:$0xff]
      %v541 = vld [vmem:[#allocation2 + $0x60] sm:$0xff]
      %v542 = vld [vmem:[#allocation2 + $0x68] sm:$0xff]
      %v543 = vld [vmem:[#allocation2 + $0x70] sm:$0xff]
      %v544 = vld [vmem:[#allocation2 + $0x78] sm:$0xff]
      %v545 = vld [vmem:[#allocation2 + $0x80] sm:$0xff]
      %v546 = vld [vmem:[#allocation2 + $0x88] sm:$0xff]
      %v547 = vld [vmem:[%s3] sm:$0xff]
      %v548 = vld [vmem:[%s4] sm:$0xff]
      %550 = vset.pattern.permute.xlu0 0
      %551 = vperm.xlu0 %550, %v548
      %v552 = vpop.permute.xlu0 %551
      %v555 = vsel %vm395, %v547, 0
      %557 = vmatpush.msra.mxu0 0.0
      %558 = vmatpush.msra.mxu0 0.0
      %559 = vmatpush.msra.mxu0 0.0
      %560 = vmatpush.msra.mxu0 0.0
      %561 = vmatpush.msra.mxu0 0.0
      %562 = vmatpush.msra.mxu0 0.0
      %563 = vmatpush.msra.mxu0 0.0
      %564 = vmatpush.msra.mxu0 %v545
      %565 = vmatpush.msra.mxu0 %v543
      %566 = vmatpush.msra.mxu0 %v541
      %567 = vmatpush.msra.mxu0 %v539
      %568 = vmatpush.msra.mxu0 %v537
      %569 = vmatpush.msra.mxu0 %v535
      %570 = vmatpush.msra.mxu0 %v533
      %571 = vmatpush.msra.mxu0 %v531
      %572 = vmatpush.msra.mxu0 %v529
      %573 = vmatmul.f32.gmra.mxu0 %v555
      %v574 = vpop.f32.mrf.mxu0
      %v575 = vadd.f32 %v552, %v574
      %576 = vdwg.mxu0
      %577 = vmatpush.msra.mxu0 0.0
      %578 = vmatpush.msra.mxu0 0.0
      %579 = vmatpush.msra.mxu0 0.0
      %580 = vmatpush.msra.mxu0 0.0
      %581 = vmatpush.msra.mxu0 0.0
      %582 = vmatpush.msra.mxu0 0.0
      %583 = vmatpush.msra.mxu0 0.0
      %584 = vmatpush.msra.mxu0 %v546
      %585 = vmatpush.msra.mxu0 %v544
      %586 = vmatpush.msra.mxu0 %v542
      %587 = vmatpush.msra.mxu0 %v540
      %588 = vmatpush.msra.mxu0 %v538
      %589 = vmatpush.msra.mxu0 %v536
      %590 = vmatpush.msra.mxu0 %v534
      %591 = vmatpush.msra.mxu0 %v532
      %592 = vmatpush.msra.mxu0 %v530
      %593 = vmatmul.f32.gmra.mxu0 %v555
      %v594 = vpop.f32.mrf.mxu0
      %v595 = vadd.f32 %v552, %v594
      %596 = vdwg.mxu0
      %vm597 = vcmp.gt.f32.partialorder %v575, 0.0
      %vm598 = vcmp.gt.f32.partialorder %v595, 0.0
      %v599 = vmul.f32 %v575, 0.01
      %v600 = vmul.f32 %v595, 0.01
      %v601 = vsel %vm597, %v575, %v599
      %v602 = vsel %vm598, %v595, %v600
      %603 = vst [vmem:[%s251] sm:$0xff] %v601
      %604 = vst [vmem:[%s251 + $0x8] sm:$0xff] %v602
      %p605 = scmp.lt.s32.totalorder %s17, 1
      %s606 = scalar_select %p605, %s17, 1
      %s607 = smul.addr %s606, 2
      %s608 = smul.addr %s607, 8
      %s609 = scalar_lea.vmem %s6, %s608
      // Predicated region
      $region45: #{_double_conv01_forward.1} parent=43 // pred_check
        %p610 = pneg %p166
      $region46: #{_double_conv01_forward.1} parent=43 // pred_check_branch
        %612 = sbr.rel (%p610) target = $region48
      $region47: #{_double_conv01_forward.1} parent=43 // pred_region
        _
      $region48: #{_double_conv01_forward.1} parent=43 // pred_fallthru
        _
    $region44: #{_double_conv01_forward.1} parent=5 // pred_fallthru
      _
    %p613 = scmp.le.s32.totalorder 2, %s12
    // Predicated region
    $region49: #{_double_conv01_forward.1} parent=5 // pred_check
      %p614 = pneg %p613
    $region50: #{_double_conv01_forward.1} parent=5 // pred_check_branch
      %616 = sbr.rel (%p614) target = $region52
    $region51: #{_double_conv01_forward.1} parent=5 // pred_region
      %s617 = ssub.s32 %s12, 2
      // Predicated region
      $region53: #{_double_conv01_forward.1} parent=51 // pred_check
        %p618 = pneg %p172
      $region54: #{_double_conv01_forward.1} parent=51 // pred_check_branch
        %620 = sbr.rel (%p618) target = $region56
      $region55: #{_double_conv01_forward.1} parent=51 // pred_region
        %p621 = scmp.lt.s32.totalorder %s18, 1
        %s622 = scalar_select %p621, %s18, 1
        %s623 = smul.addr %s622, 2
        %s624 = smul.addr %s623, 8
        %s625 = scalar_lea.vmem %s6, %s624
      $region56: #{_double_conv01_forward.1} parent=51 // pred_fallthru
        _
    $region52: #{_double_conv01_forward.1} parent=5 // pred_fallthru
      _
  $region6: #{_double_conv01_forward.1} parent=0 // loop_footer
    %s16 = sadd.s32 1, %s12
  $region7: #{_double_conv01_forward.1} parent=0 // loop_footer_branch
    %11 = sbr.rel target = $region3
  $region8: #{_double_conv01_forward.1} parent=0 // loop_exit
    _

</llo_original>
